<compile_context>
chip_gen: v7x
topology: tpu7x:2x2x1
jax: 0.10.0
libtpu: 0.0.40
codegen_flags: <defaults>
</compile_context>

<pallas_src>
import jax
import jax.numpy as jnp
from jax.experimental import pallas as pl
from jax.experimental.pallas import tpu as pltpu

NEGATIVE_SLOPE = 0.2
TARGET_TILE = 64 * 1024  # pixels per grid step (multiple of 128)


def _round_up(a, b):
    return (a + b - 1) // b * b


def fused_model_kernel(x_ref, wb_ref, o_ref):
    """Interior pixels of the whole forward pass.

      v9[0:3] = where(W1[0:3] @ x + b1[0:3] > 2, ., 0.2*.)   # only channels used
      v10     = W1 @ v9[0:3] + b1

    K == 3, so the contractions are 3 broadcast FMAs on the VPU instead of an
    almost-empty MXU tile.  All intermediates and the store are lane-dense.
    """
    wb = wb_ref[...]                 # (8, 4): [:, :3] = conv1 weight, [:, 3] = bias
    w1 = wb[:, 0:3]                  # (8, 3)
    b1 = wb[:, 3:4]                  # (8, 1)
    w13 = wb[0:3, 0:3]               # (3, 3)  only conv1 rows 0..2 feed v10
    b13 = wb[0:3, 3:4]               # (3, 1)

    x = x_ref[...]                   # (3, TM)

    # Stage 1 (trimmed to the 3 live channels).  NOTE: threshold is 2.0
    # (mirrors the torch graph's `v1 > 2`), not a standard LeakyReLU at 0.
    v9 = (b13
          + w13[:, 0:1] * x[0:1, :]
          + w13[:, 1:2] * x[1:2, :]
          + w13[:, 2:3] * x[2:3, :])                       # (3, TM)
    v9 = jnp.where(v9 > 2.0, v9, v9 * NEGATIVE_SLOPE)

    # Stage 2: conv1 applied to v9's first 3 channels.
    # TODO(synk): on v7x, if a bundle dump shows VALU saturated, this 8x3
    # contraction could move to the MXU with a (pixels, channels) tile layout.
    v10 = (b1
           + w1[:, 0:1] * v9[0:1, :]
           + w1[:, 1:2] * v9[1:2, :]
           + w1[:, 2:3] * v9[2:3, :])                      # (8, TM)
    o_ref[...] = v10                                       # single full store


def model_forward(x_nchw, w1, b1, w2, b2):
    # TODO(synk): the PyTorch module calls conv1 (in_channels=3) on the
    # 16-channel v9, which raises a channel-mismatch error in torch; we keep
    # the previously chosen runnable semantics of applying conv1 to v9's first
    # 3 channels, which makes conv2 / w2 / b2 dead (never computed).
    del w2, b2
    n, c, h, w = x_nchw.shape
    assert c == 3, "model expects 3 input channels"

    w1m = w1.reshape(8, 3).astype(jnp.float32)
    b1v = b1.reshape(8).astype(jnp.float32)
    wb = jnp.concatenate([w1m, b1v.reshape(8, 1)], axis=1)          # (8, 4)

    hw = h * w
    hw128 = _round_up(hw, 128)
    tm = min(TARGET_TILE, hw128)
    n_tiles = _round_up(hw, tm) // tm
    if n * n_tiles < 2 and hw128 >= 256:
        # keep >= 2 grid steps so both v7x TensorCores get work
        tm = _round_up(-(-hw128 // 2), 128)
        n_tiles = _round_up(hw, tm) // tm
    hw_pad = n_tiles * tm

    x3 = x_nchw.astype(jnp.float32).reshape(n, 3, hw)                # free reshape
    if hw_pad != hw:
        x3 = jnp.pad(x3, ((0, 0), (0, 0), (0, hw_pad - hw)))

    v10_flat = pl.pallas_call(
        fused_model_kernel,
        out_shape=jax.ShapeDtypeStruct((n, 8, hw_pad), jnp.float32),
        grid_spec=pltpu.PrefetchScalarGridSpec(
            num_scalar_prefetch=0,
            grid=(n, n_tiles),
            in_specs=[
                pl.BlockSpec((None, 3, tm), lambda b, i: (b, 0, i)),  # pixel tile
                pl.BlockSpec((8, 4), lambda b, i: (0, 0)),            # resident weights
            ],
            out_specs=pl.BlockSpec((None, 8, tm), lambda b, i: (b, 0, i)),
        ),
        compiler_params=pltpu.CompilerParams(
            dimension_semantics=("parallel", "parallel"),
            vmem_limit_bytes=32 * 1024 * 1024),
    )(x3, wb)

    v10_int = v10_flat[:, :, :hw].reshape(n, 8, h, w)                # free reshape

    # Padded rows of the two convs are known per-channel constants:
    #   outermost ring of the (H+4, W+4) grid  -> b1
    #   next ring (v9's spatial-pad border)    -> W1 @ leaky2(b1[:3]) + b1
    v9_border3 = jnp.where(b1v[:3] > 2.0, b1v[:3], b1v[:3] * NEGATIVE_SLOPE)
    ring1 = w1m @ v9_border3 + b1v                                   # (8,)

    hp, wp = h + 4, w + 4
    iy = jnp.arange(hp)
    ix = jnp.arange(wp)
    ring = jnp.minimum(jnp.minimum(iy, hp - 1 - iy)[:, None],
                       jnp.minimum(ix, wp - 1 - ix)[None, :])        # (hp, wp)
    border = jnp.where((ring == 0)[None, :, :],
                       b1v[:, None, None], ring1[:, None, None])     # (8, hp, wp)
    out = jnp.broadcast_to(border[None], (n, 8, hp, wp))
    out = jax.lax.dynamic_update_slice(out, v10_int, (0, 0, 2, 2))
    return out


def _ref_forward(x, w1, b1, w2, b2):
    """Pure-JAX reference of the same chosen semantics (for correctness)."""
    def conv1x1_pad1(inp, wm, bv):
        ip = jnp.pad(inp, ((0, 0), (0, 0), (1, 1), (1, 1)))
        return jnp.einsum("nchw,oc->nohw", ip, wm) + bv.reshape(1, -1, 1, 1)

    w1m, w2m = w1.reshape(8, 3), w2.reshape(8, 3)
    v1 = conv1x1_pad1(x, w1m, b1)
    v4 = jnp.where(v1 > 2.0, v1, v1 * NEGATIVE_SLOPE)
    v5 = conv1x1_pad1(x, w2m, b2)
    v8 = jnp.where(v5 > 2.0, v5, v5 * NEGATIVE_SLOPE)
    v9 = jnp.concatenate([v4, v8], axis=1)
    return conv1x1_pad1(v9[:, :3], w1m, b1)


if __name__ == "__main__":
    key = jax.random.PRNGKey(0)
    kx, k1, k2, k3, k4, kx2 = jax.random.split(key, 6)

    N, C, H, W = 2, 3, 16, 16
    x = jax.random.normal(kx, (N, C, H, W), dtype=jnp.float32)

    # Deterministic Conv2d(3, 8, 1) parameters (weight (8,3,1,1), bias (8,)).
    w1 = jax.random.normal(k1, (8, 3, 1, 1), dtype=jnp.float32) * 0.5
    b1 = jax.random.normal(k2, (8,), dtype=jnp.float32) * 0.1
    w2 = jax.random.normal(k3, (8, 3, 1, 1), dtype=jnp.float32) * 0.5
    b2 = jax.random.normal(k4, (8,), dtype=jnp.float32) * 0.1

    fwd = jax.jit(model_forward)
    out = fwd(x, w1, b1, w2, b2)
    jax.block_until_ready(out)
    assert out.shape == (N, 8, H + 4, W + 4), out.shape
    ref = _ref_forward(x, w1, b1, w2, b2)
    assert jnp.allclose(out, ref, atol=1e-4, rtol=1e-4), "mismatch vs reference"

    # Second shape: H*W not a multiple of 128 and N > 2 (exercises padding fold).
    N2, H2, W2 = 3, 10, 12
    x2 = jax.random.normal(kx2, (N2, 3, H2, W2), dtype=jnp.float32)
    out2 = jax.jit(model_forward)(x2, w1, b1, w2, b2)
    jax.block_until_ready(out2)
    assert out2.shape == (N2, 8, H2 + 4, W2 + 4), out2.shape
    ref2 = _ref_forward(x2, w1, b1, w2, b2)
    assert jnp.allclose(out2, ref2, atol=1e-4, rtol=1e-4), "mismatch vs reference (ragged)"

    print("KERNEL_OK")
</pallas_src>

<mosaic_0001>
module attributes {stable_mosaic.version = 11 : i64} {
  func.func @fused_model_kernel(%arg0: i32, %arg1: i32, %arg2: memref<1x3x256xf32, #tpu.memory_space<vmem>>, %arg3: memref<8x4xf32, #tpu.memory_space<vmem>>, %arg4: memref<1x8x256xf32, #tpu.memory_space<vmem>>) attributes {dimension_semantics = [#tpu.dimension_semantics<parallel>, #tpu.dimension_semantics<parallel>], iteration_bounds = array<i64: 2, 1>, scalar_prefetch = 0 : i64, scratch_operands = 0 : i64, tpu.core_type = #tpu.core_type<tc>, window_params = [{transform_indices = @transform_0, window_bounds = array<i64: 1, 3, 256>}, {pipeline_mode = #tpu.pipeline_mode<synchronous>, transform_indices = @transform_1, window_bounds = array<i64: 8, 4>}, {transform_indices = @transform_2, window_bounds = array<i64: 1, 8, 256>}]} {
    %c0 = arith.constant 0 : index
    %c0_0 = arith.constant 0 : index
    %0 = vector.load %arg3[%c0, %c0_0] : memref<8x4xf32, #tpu.memory_space<vmem>>, vector<8x4xf32>
    %1 = vector.extract_strided_slice %0 {offsets = [0, 0], sizes = [8, 3], strides = [1, 1]} : vector<8x4xf32> to vector<8x3xf32>
    %2 = vector.extract_strided_slice %0 {offsets = [0, 3], sizes = [8, 1], strides = [1, 1]} : vector<8x4xf32> to vector<8x1xf32>
    %3 = vector.extract_strided_slice %0 {offsets = [0, 0], sizes = [3, 3], strides = [1, 1]} : vector<8x4xf32> to vector<3x3xf32>
    %4 = vector.extract_strided_slice %0 {offsets = [0, 3], sizes = [3, 1], strides = [1, 1]} : vector<8x4xf32> to vector<3x1xf32>
    %c0_1 = arith.constant 0 : index
    %c0_2 = arith.constant 0 : index
    %c0_3 = arith.constant 0 : index
    %5 = vector.load %arg2[%c0_1, %c0_2, %c0_3] : memref<1x3x256xf32, #tpu.memory_space<vmem>>, vector<1x3x256xf32>
    %6 = vector.shape_cast %5 : vector<1x3x256xf32> to vector<3x256xf32>
    %7 = vector.extract_strided_slice %3 {offsets = [0, 0], sizes = [3, 1], strides = [1, 1]} : vector<3x3xf32> to vector<3x1xf32>
    %8 = vector.extract_strided_slice %6 {offsets = [0, 0], sizes = [1, 256], strides = [1, 1]} : vector<3x256xf32> to vector<1x256xf32>
    %9 = vector.broadcast %7 : vector<3x1xf32> to vector<3x256xf32>
    %10 = vector.broadcast %8 : vector<1x256xf32> to vector<3x256xf32>
    %11 = arith.mulf %9, %10 : vector<3x256xf32>
    %12 = vector.broadcast %4 : vector<3x1xf32> to vector<3x256xf32>
    %13 = arith.addf %12, %11 : vector<3x256xf32>
    %14 = vector.extract_strided_slice %3 {offsets = [0, 1], sizes = [3, 1], strides = [1, 1]} : vector<3x3xf32> to vector<3x1xf32>
    %15 = vector.extract_strided_slice %6 {offsets = [1, 0], sizes = [1, 256], strides = [1, 1]} : vector<3x256xf32> to vector<1x256xf32>
    %16 = vector.broadcast %14 : vector<3x1xf32> to vector<3x256xf32>
    %17 = vector.broadcast %15 : vector<1x256xf32> to vector<3x256xf32>
    %18 = arith.mulf %16, %17 : vector<3x256xf32>
    %19 = arith.addf %13, %18 : vector<3x256xf32>
    %20 = vector.extract_strided_slice %3 {offsets = [0, 2], sizes = [3, 1], strides = [1, 1]} : vector<3x3xf32> to vector<3x1xf32>
    %21 = vector.extract_strided_slice %6 {offsets = [2, 0], sizes = [1, 256], strides = [1, 1]} : vector<3x256xf32> to vector<1x256xf32>
    %22 = vector.broadcast %20 : vector<3x1xf32> to vector<3x256xf32>
    %23 = vector.broadcast %21 : vector<1x256xf32> to vector<3x256xf32>
    %24 = arith.mulf %22, %23 : vector<3x256xf32>
    %25 = arith.addf %19, %24 : vector<3x256xf32>
    %cst = arith.constant 2.000000e+00 : f32
    %26 = vector.broadcast %cst : f32 to vector<3x256xf32>
    %27 = arith.cmpf ogt, %25, %26 : vector<3x256xf32>
    %cst_4 = arith.constant 2.000000e-01 : f32
    %28 = vector.broadcast %cst_4 : f32 to vector<3x256xf32>
    %29 = arith.mulf %25, %28 : vector<3x256xf32>
    %30 = arith.select %27, %25, %29 : vector<3x256xi1>, vector<3x256xf32>
    %31 = vector.extract_strided_slice %1 {offsets = [0, 0], sizes = [8, 1], strides = [1, 1]} : vector<8x3xf32> to vector<8x1xf32>
    %32 = vector.extract_strided_slice %30 {offsets = [0, 0], sizes = [1, 256], strides = [1, 1]} : vector<3x256xf32> to vector<1x256xf32>
    %33 = vector.broadcast %31 : vector<8x1xf32> to vector<8x256xf32>
    %34 = vector.broadcast %32 : vector<1x256xf32> to vector<8x256xf32>
    %35 = arith.mulf %33, %34 : vector<8x256xf32>
    %36 = vector.broadcast %2 : vector<8x1xf32> to vector<8x256xf32>
    %37 = arith.addf %36, %35 : vector<8x256xf32>
    %38 = vector.extract_strided_slice %1 {offsets = [0, 1], sizes = [8, 1], strides = [1, 1]} : vector<8x3xf32> to vector<8x1xf32>
    %39 = vector.extract_strided_slice %30 {offsets = [1, 0], sizes = [1, 256], strides = [1, 1]} : vector<3x256xf32> to vector<1x256xf32>
    %40 = vector.broadcast %38 : vector<8x1xf32> to vector<8x256xf32>
    %41 = vector.broadcast %39 : vector<1x256xf32> to vector<8x256xf32>
    %42 = arith.mulf %40, %41 : vector<8x256xf32>
    %43 = arith.addf %37, %42 : vector<8x256xf32>
    %44 = vector.extract_strided_slice %1 {offsets = [0, 2], sizes = [8, 1], strides = [1, 1]} : vector<8x3xf32> to vector<8x1xf32>
    %45 = vector.extract_strided_slice %30 {offsets = [2, 0], sizes = [1, 256], strides = [1, 1]} : vector<3x256xf32> to vector<1x256xf32>
    %46 = vector.broadcast %44 : vector<8x1xf32> to vector<8x256xf32>
    %47 = vector.broadcast %45 : vector<1x256xf32> to vector<8x256xf32>
    %48 = arith.mulf %46, %47 : vector<8x256xf32>
    %49 = arith.addf %43, %48 : vector<8x256xf32>
    %c0_5 = arith.constant 0 : index
    %c0_6 = arith.constant 0 : index
    %c0_7 = arith.constant 0 : index
    %50 = vector.load %arg4[%c0_5, %c0_6, %c0_7] : memref<1x8x256xf32, #tpu.memory_space<vmem>>, vector<1x8x256xf32>
    %51 = vector.shape_cast %50 : vector<1x8x256xf32> to vector<8x256xf32>
    %52 = vector.shape_cast %49 : vector<8x256xf32> to vector<1x8x256xf32>
    tpu.vector_store %arg4[%c0_5, %c0_6, %c0_7], %52 {strides = array<i32>} : memref<1x8x256xf32, #tpu.memory_space<vmem>>, vector<1x8x256xf32>,
    return
  }
  func.func @transform_0(%arg0: i32, %arg1: i32) -> (i32, i32, i32) {
    %c0_i32 = arith.constant 0 : i32
    %c0_i32_0 = arith.constant 0 : i32
    return %arg0, %c0_i32, %arg1 : i32, i32, i32
  }
  func.func @transform_1(%arg0: i32, %arg1: i32) -> (i32, i32) {
    %c0_i32 = arith.constant 0 : i32
    %c0_i32_0 = arith.constant 0 : i32
    %c0_i32_1 = arith.constant 0 : i32
    return %c0_i32, %c0_i32_0 : i32, i32
  }
  func.func @transform_2(%arg0: i32, %arg1: i32) -> (i32, i32, i32) {
    %c0_i32 = arith.constant 0 : i32
    %c0_i32_0 = arith.constant 0 : i32
    return %arg0, %c0_i32, %arg1 : i32, i32, i32
  }
}

</mosaic_0001>

<llo_original>
// kernel: model_forward.1
$region0: #{model_forward.1}
  #allocation0 [shape = 'u32[]', space=smem, size = 0x4, offset = 0x4, fixed_abs, tag = 'smem constant byte address 0x4 - core index']
  #allocation1 [shape = 'u32[144,128]{1,0:T(1,128)}', space=vmem, size = 0x12000, scoped, tag = 'internal scratch']
  %s0 = inlined_call_operand.vmem [shape: f32[2,3,256], index: 0, kind: input, shape index: {}]
  %s1 = inlined_call_operand.vmem [shape: f32[8,4], index: 1, kind: input, shape index: {}]
  %s2 = inlined_call_operand.vmem [shape: f32[2,8,256], index: 2, kind: output, shape index: {}]
  %s3 = sld [smem:[#allocation0]]
  $region41: #{model_forward.1} parent=0
    _
  %s5 = ssub.s32 1, %s3
  %s6 = scalar_select 0, %s5, %s3
  loop: start=0, step=1, limit=4
  $region2: #{model_forward.1} parent=0 // loop_pre_header
    _
  $region3: #{model_forward.1} parent=0 // loop_header
    %s8 = sphi 0, %s12
    %p9 = scmp.ge.s32.totalorder %s8, 4
    %s15 = sphi 0, %s27
    %s16 = sphi 0, %s23
    %s17 = sphi 0, %s15
    %s18 = sphi 0, %s16
    %s19 = sphi 0, %s17
    %s20 = sphi 0, %s18
    %s32 = sphi 0, %s34
    %s35 = sphi 0, %s32
    %s36 = sphi 0, %s35
    %s52 = sphi 0, %s36
    %s56 = sphi 0, %s56
    %s58 = sphi 0, %s56
    %s59 = sphi 0, %s58
    %s73 = sphi 0, %s59
    %s81 = sphi 0, %s83
    %s84 = sphi 0, %s81
    %s85 = sphi 0, %s84
    %s101 = sphi 0, %s85
  $region4: #{model_forward.1} parent=0 // loop_header_branch
    %11 = sbr.rel (%p9) target = $region8
  $region5: #{model_forward.1} parent=0 // loop_body
    %s13 = ssub.s32 %s8, 1
    %s14 = ssub.s32 %s8, 2
    %s21 = sadd.s32 1, %s16
    %p22 = scmp.ge.s32.totalorder %s21, 1
    %s23 = scalar_select %p22, 0, %s21
    %s24 = sadd.s32 1, %s15
    %s25 = scalar_select %p22, %s24, %s15
    %p26 = scmp.ge.s32.totalorder %s25, 2
    %s27 = scalar_select %p26, 0, %s25
    %s28 = ssub.s32 %s15, %s27
    %s29 = ssub.s32 %s16, %s23
    %s30 = sor.u32 %s28, %s29
    %p31 = scmp.eq.s32.totalorder %s30, 0
    %s33 = sadd.s32 %s32, 1
    %s34 = scalar_select %p31, %s32, %s33
    %p37 = pneg %p31
    %p38 = scmp.eq.s32.totalorder %s8, 1
    %p39 = por %p37, %p38
    %p40 = scmp.ne.s32.totalorder %s32, %s35
    %p41 = scmp.eq.s32.totalorder %s8, 0
    %p42 = por %p40, %p41
    %p43 = scmp.ne.s32.totalorder %s32, %s35
    %p44 = scmp.eq.s32.totalorder %s13, 1
    %p45 = por %p43, %p44
    %p46 = scmp.ne.s32.totalorder %s35, %s36
    %p47 = scmp.eq.s32.totalorder %s13, 0
    %p48 = por %p46, %p47
    %p49 = scmp.ne.s32.totalorder %s35, %s36
    %p50 = scmp.eq.s32.totalorder %s14, 1
    %p51 = por %p49, %p50
    %p53 = scmp.ne.s32.totalorder %s36, %s52
    %p54 = scmp.eq.s32.totalorder %s14, 0
    %p55 = por %p53, %p54
    %s57 = sadd.s32 %s56, 1
    %p60 = scmp.eq.s32.totalorder %s8, 1
    %p61 = scmp.ne.s32.totalorder %s56, %s58
    %p62 = scmp.eq.s32.totalorder %s8, 0
    %p63 = por %p61, %p62
    %p64 = scmp.ne.s32.totalorder %s56, %s58
    %p65 = scmp.eq.s32.totalorder %s13, 1
    %p66 = por %p64, %p65
    %p67 = scmp.ne.s32.totalorder %s58, %s59
    %p68 = scmp.eq.s32.totalorder %s13, 0
    %p69 = por %p67, %p68
    %p70 = scmp.ne.s32.totalorder %s58, %s59
    %p71 = scmp.eq.s32.totalorder %s14, 1
    %p72 = por %p70, %p71
    %p74 = scmp.ne.s32.totalorder %s59, %s73
    %p75 = scmp.eq.s32.totalorder %s14, 0
    %p76 = por %p74, %p75
    %s77 = ssub.s32 %s15, %s27
    %s78 = ssub.s32 %s16, %s23
    %s79 = sor.u32 %s77, %s78
    %p80 = scmp.eq.s32.totalorder %s79, 0
    %s82 = sadd.s32 %s81, 1
    %s83 = scalar_select %p80, %s81, %s82
    %p86 = pneg %p80
    %p87 = scmp.eq.s32.totalorder %s8, 1
    %p88 = por %p86, %p87
    %p89 = scmp.ne.s32.totalorder %s81, %s84
    %p90 = scmp.eq.s32.totalorder %s8, 0
    %p91 = por %p89, %p90
    %p92 = scmp.ne.s32.totalorder %s81, %s84
    %p93 = scmp.eq.s32.totalorder %s13, 1
    %p94 = por %p92, %p93
    %p95 = scmp.ne.s32.totalorder %s84, %s85
    %p96 = scmp.eq.s32.totalorder %s13, 0
    %p97 = por %p95, %p96
    %p98 = scmp.ne.s32.totalorder %s84, %s85
    %p99 = scmp.eq.s32.totalorder %s14, 1
    %p100 = por %p98, %p99
    %p102 = scmp.ne.s32.totalorder %s85, %s101
    %p103 = scmp.eq.s32.totalorder %s14, 0
    %p104 = por %p102, %p103
    %p105 = scmp.le.s32.totalorder 1, %s8
    %p106 = scmp.lt.s32.totalorder %s8, 3
    %p107 = pnand %p105, %p106
    %p108 = pneg %p107
    // Predicated region
    $region9: #{model_forward.1} parent=5 // pred_check
      _
    $region10: #{model_forward.1} parent=5 // pred_check_branch
      %110 = sbr.rel (%p107) target = $region12
    $region11: #{model_forward.1} parent=5 // pred_region
      %s111 = ssub.s32 %s8, 1
      // Predicated region
      $region13: #{model_forward.1} parent=11 // pred_check
        %p112 = pneg %p69
      $region14: #{model_forward.1} parent=11 // pred_check_branch
        %114 = sbr.rel (%p112) target = $region16
      $region15: #{model_forward.1} parent=11 // pred_region
        _
      $region16: #{model_forward.1} parent=11 // pred_fallthru
        _
    $region12: #{model_forward.1} parent=5 // pred_fallthru
      _
    %p115 = scmp.lt.s32.totalorder %s8, 2
    // Predicated region
    $region17: #{model_forward.1} parent=5 // pred_check
      %p116 = pneg %p115
    $region18: #{model_forward.1} parent=5 // pred_check_branch
      %118 = sbr.rel (%p116) target = $region20
    $region19: #{model_forward.1} parent=5 // pred_region
      // Predicated region
      $region21: #{model_forward.1} parent=19 // pred_check
        %p119 = pneg %p42
      $region22: #{model_forward.1} parent=19 // pred_check_branch
        %121 = sbr.rel (%p119) target = $region24
      $region23: #{model_forward.1} parent=19 // pred_region
        %s122 = smul.u32 2, %s16
        %p123 = scmp.lt.s32.totalorder %s15, 1
        %s124 = scalar_select %p123, %s15, 1
        %p125 = scmp.lt.s32.totalorder %s122, 1
        %s126 = scalar_select %p125, %s122, 1
        %s127 = smul.addr %s124, 2
        %s128 = sadd.s32 %s126, %s127
        %s129 = smul.addr %s128, 4
        %s130 = scalar_lea.vmem %s0, %s129
        %s131 = smul.u32 2, %s16
      $region24: #{model_forward.1} parent=19 // pred_fallthru
        _
    $region20: #{model_forward.1} parent=5 // pred_fallthru
      _
    %p132 = scmp.le.s32.totalorder 1, %s8
    %p133 = scmp.lt.s32.totalorder %s8, 3
    %p134 = pnand %p132, %p133
    %p135 = pneg %p134
    // Predicated region
    $region25: #{model_forward.1} parent=5 // pred_check
      _
    $region26: #{model_forward.1} parent=5 // pred_check_branch
      %137 = sbr.rel (%p134) target = $region28
    $region27: #{model_forward.1} parent=5 // pred_region
      %s138 = ssub.s32 %s8, 1
      %s139 = smul.u32 2, %s18
      %p140 = scmp.lt.s32.totalorder %s17, 1
      %s141 = scalar_select %p140, %s17, 1
      %p142 = scmp.lt.s32.totalorder %s139, 1
      %s143 = scalar_select %p142, %s139, 1
      %s144 = smul.addr %s141, 2
      %s145 = sadd.s32 %s143, %s144
      %s146 = smul.addr %s145, 4
      %s147 = scalar_lea.vmem %s0, %s146
      %p148 = pneg %p48
      %p149 = pneg %p45
      %p150 = pneg %p69
      %p151 = pneg %p66
      %p152 = pneg %p97
      %p153 = pneg %p94
      %s154 = smul.u32 2, %s18
      %p155 = scmp.lt.s32.totalorder %s17, 1
      %s156 = scalar_select %p155, %s17, 1
      %p157 = scmp.lt.s32.totalorder %s154, 1
      %s158 = scalar_select %p157, %s154, 1
      %s159 = smul.addr %s156, 2
      %s160 = sadd.s32 %s158, %s159
      %s161 = smul.addr %s160, 8
      %s162 = scalar_lea.vmem %s2, %s161
      %s163 = smul.u32 2, %s18
      %p164 = scmp.lt.s32.totalorder %s17, 1
      %s165 = scalar_select %p164, %s17, 1
      %p166 = scmp.lt.s32.totalorder %s163, 1
      %s167 = scalar_select %p166, %s163, 1
      %s168 = smul.addr %s165, 2
      %s169 = sadd.s32 %s167, %s168
      %s170 = smul.addr %s169, 4
      %s171 = scalar_lea.vmem %s0, %s170
      %s172 = smul.u32 2, %s18
      %s173 = smul.u32 2, %s18
      %p174 = scmp.lt.s32.totalorder %s17, 1
      %s175 = scalar_select %p174, %s17, 1
      %p176 = scmp.lt.s32.totalorder %s173, 1
      %s177 = scalar_select %p176, %s173, 1
      %s178 = smul.addr %s175, 2
      %s179 = sadd.s32 %s177, %s178
      %s180 = smul.addr %s179, 8
      %s181 = scalar_lea.vmem %s2, %s180
      %s182 = smul.u32 2, %s18
      %v183 = vld [vmem:[%s1] sm:$0xff]
      %v184 = vld [vmem:[%s171] sm:$0x77]
      %186 = vset.pattern.permute.xlu0 0
      %187 = vperm.xlu0 %186, %v183
      %v188 = vpop.permute.xlu0 %187
      %v191 = vlaneseq
      %v192 = vshrl.u32 %v191, 7
      %v193 = vsub.s32 0, %v192
      %v194 = vrot.slane %v184, %v193
      %v195 = vlaneseq
      %v196 = vshrl.u32 %v195, 7
      %v197 = vsub.s32 4, %v196
      %v198 = vrot.slane %v184, %v197
      %v201 = vlaneseq
      %v202 = vshrl.u32 %v201, 7
      %v203 = vsub.s32 0, %v202
      %v204 = vrot.slane %v194, %v203
      %v205 = vlaneseq
      %v206 = vshrl.u32 %v205, 7
      %v207 = vsub.s32 0, %v206
      %v208 = vrot.slane %v198, %v207
      %v209 = vmul.f32 %v188, %v204
      %v210 = vmul.f32 %v188, %v208
      %211 = vset.pattern.permute.xlu0 3
      %212 = vperm.xlu0 %211, %v183
      %v213 = vpop.permute.xlu0 %212
      %v215 = vadd.f32 %v213, %v209
      %v216 = vadd.f32 %v213, %v210
      %217 = vset.pattern.permute.xlu0 1
      %218 = vperm.xlu0 %217, %v183
      %v219 = vpop.permute.xlu0 %218
      %v221 = vlaneseq
      %v222 = vshrl.u32 %v221, 7
      %v223 = vsub.s32 1, %v222
      %v224 = vrot.slane %v184, %v223
      %v225 = vlaneseq
      %v226 = vshrl.u32 %v225, 7
      %v227 = vsub.s32 5, %v226
      %v228 = vrot.slane %v184, %v227
      %v231 = vlaneseq
      %v232 = vshrl.u32 %v231, 7
      %v233 = vsub.s32 1, %v232
      %v234 = vrot.slane %v224, %v233
      %v235 = vlaneseq
      %v236 = vshrl.u32 %v235, 7
      %v237 = vsub.s32 1, %v236
      %v238 = vrot.slane %v228, %v237
      %v239 = vmul.f32 %v219, %v234
      %v240 = vmul.f32 %v219, %v238
      %v241 = vadd.f32 %v215, %v239
      %v242 = vadd.f32 %v216, %v240
      %243 = vset.pattern.permute.xlu0 2
      %244 = vperm.xlu0 %243, %v183
      %v245 = vpop.permute.xlu0 %244
      %v247 = vlaneseq
      %v248 = vshrl.u32 %v247, 7
      %v249 = vsub.s32 2, %v248
      %v250 = vrot.slane %v184, %v249
      %v251 = vlaneseq
      %v252 = vshrl.u32 %v251, 7
      %v253 = vsub.s32 6, %v252
      %v254 = vrot.slane %v184, %v253
      %v257 = vlaneseq
      %v258 = vshrl.u32 %v257, 7
      %v259 = vsub.s32 2, %v258
      %v260 = vrot.slane %v250, %v259
      %v261 = vlaneseq
      %v262 = vshrl.u32 %v261, 7
      %v263 = vsub.s32 2, %v262
      %v264 = vrot.slane %v254, %v263
      %v265 = vmul.f32 %v245, %v260
      %v266 = vmul.f32 %v245, %v264
      %v267 = vadd.f32 %v241, %v265
      %v268 = vadd.f32 %v242, %v266
      %vm269 = vcmp.gt.f32.partialorder %v267, 2.0
      %vm270 = vcmp.gt.f32.partialorder %v268, 2.0
      %v271 = vmul.f32 %v267, 0.2
      %v272 = vmul.f32 %v268, 0.2
      %v273 = vsel %vm269, %v267, %v271
      %v274 = vsel %vm270, %v268, %v272
      %v275 = vlaneseq
      %v276 = vshrl.u32 %v275, 7
      %v277 = vsub.s32 0, %v276
      %v278 = vrot.slane %v273, %v277
      %v279 = vlaneseq
      %v280 = vshrl.u32 %v279, 7
      %v281 = vsub.s32 0, %v280
      %v282 = vrot.slane %v274, %v281
      %v283 = vmul.f32 %v188, %v278
      %v284 = vmul.f32 %v188, %v282
      %v285 = vadd.f32 %v213, %v283
      %v286 = vadd.f32 %v213, %v284
      %v287 = vlaneseq
      %v288 = vshrl.u32 %v287, 7
      %v289 = vsub.s32 1, %v288
      %v290 = vrot.slane %v273, %v289
      %v291 = vlaneseq
      %v292 = vshrl.u32 %v291, 7
      %v293 = vsub.s32 1, %v292
      %v294 = vrot.slane %v274, %v293
      %v295 = vmul.f32 %v219, %v290
      %v296 = vmul.f32 %v219, %v294
      %v297 = vadd.f32 %v285, %v295
      %v298 = vadd.f32 %v286, %v296
      %v299 = vlaneseq
      %v300 = vshrl.u32 %v299, 7
      %v301 = vsub.s32 2, %v300
      %v302 = vrot.slane %v273, %v301
      %v303 = vlaneseq
      %v304 = vshrl.u32 %v303, 7
      %v305 = vsub.s32 2, %v304
      %v306 = vrot.slane %v274, %v305
      %v307 = vmul.f32 %v245, %v302
      %v308 = vmul.f32 %v245, %v306
      %v309 = vadd.f32 %v297, %v307
      %v310 = vadd.f32 %v298, %v308
      %311 = vst [vmem:[%s181] sm:$0xff] %v309
      %312 = vst [vmem:[%s181 + $0x8] sm:$0xff] %v310
      %s313 = smul.u32 2, %s18
      %p314 = scmp.lt.s32.totalorder %s17, 1
      %s315 = scalar_select %p314, %s17, 1
      %p316 = scmp.lt.s32.totalorder %s313, 1
      %s317 = scalar_select %p316, %s313, 1
      %s318 = smul.addr %s315, 2
      %s319 = sadd.s32 %s317, %s318
      %s320 = smul.addr %s319, 8
      %s321 = scalar_lea.vmem %s2, %s320
      // Predicated region
      $region29: #{model_forward.1} parent=27 // pred_check
        %p322 = pneg %p94
      $region30: #{model_forward.1} parent=27 // pred_check_branch
        %324 = sbr.rel (%p322) target = $region32
      $region31: #{model_forward.1} parent=27 // pred_region
        %s325 = smul.u32 2, %s18
      $region32: #{model_forward.1} parent=27 // pred_fallthru
        _
    $region28: #{model_forward.1} parent=5 // pred_fallthru
      _
    %p326 = scmp.le.s32.totalorder 2, %s8
    // Predicated region
    $region33: #{model_forward.1} parent=5 // pred_check
      %p327 = pneg %p326
    $region34: #{model_forward.1} parent=5 // pred_check_branch
      %329 = sbr.rel (%p327) target = $region36
    $region35: #{model_forward.1} parent=5 // pred_region
      %s330 = ssub.s32 %s8, 2
      // Predicated region
      $region37: #{model_forward.1} parent=35 // pred_check
        %p331 = pneg %p100
      $region38: #{model_forward.1} parent=35 // pred_check_branch
        %333 = sbr.rel (%p331) target = $region40
      $region39: #{model_forward.1} parent=35 // pred_region
        %s334 = smul.u32 2, %s20
        %p335 = scmp.lt.s32.totalorder %s19, 1
        %s336 = scalar_select %p335, %s19, 1
        %p337 = scmp.lt.s32.totalorder %s334, 1
        %s338 = scalar_select %p337, %s334, 1
        %s339 = smul.addr %s336, 2
        %s340 = sadd.s32 %s338, %s339
        %s341 = smul.addr %s340, 8
        %s342 = scalar_lea.vmem %s2, %s341
      $region40: #{model_forward.1} parent=35 // pred_fallthru
        _
    $region36: #{model_forward.1} parent=5 // pred_fallthru
      _
  $region6: #{model_forward.1} parent=0 // loop_footer
    %s12 = sadd.s32 1, %s8
  $region7: #{model_forward.1} parent=0 // loop_footer_branch
    %7 = sbr.rel target = $region3
  $region8: #{model_forward.1} parent=0 // loop_exit
    _

</llo_original>
